<compile_context>
chip_gen: v5e
topology: v5e:2x2
jax: 0.10.0
libtpu: 0.0.40
codegen_flags: <defaults>
</compile_context>

<pallas_src>
import functools

import jax
import jax.numpy as jnp
from jax.experimental import pallas as pl
from jax.experimental.pallas import tpu as pltpu


# ---------------------------------------------------------------------------
# Generation-aware budgets
# ---------------------------------------------------------------------------
def _round_up(x, m):
    return ((x + m - 1) // m) * m


def _cdiv(a, b):
    return (a + b - 1) // b


def _tpu_budgets():
    """(block_bytes_target, vmem_limit_bytes) per TPU generation.

    128-MiB-VMEM parts (v5e/v6e): ~8 MiB blocks under a 64 MiB scoped limit.
    64-MiB-VMEM parts (v7x):      ~6 MiB blocks under a 48 MiB scoped limit.
    Conservative fallback if the hardware query is unavailable.
    """
    vmem = None
    try:
        vmem = getattr(pltpu.get_tpu_info(), "vmem_capacity_bytes", None)
    except Exception:
        vmem = None
    if vmem is None:
        return 4 * 1024 * 1024, 32 * 1024 * 1024
    if vmem >= 100 * 1024 * 1024:          # v5e / v6e (128 MiB physical)
        return 8 * 1024 * 1024, 64 * 1024 * 1024
    return 6 * 1024 * 1024, 48 * 1024 * 1024   # v7x (64 MiB physical)


_BLOCK_BYTES_TARGET, _VMEM_LIMIT_BYTES = _tpu_budgets()


def _sublane_multiple(dtype):
    isz = jnp.dtype(dtype).itemsize
    if isz >= 4:
        return 8
    if isz == 2:
        return 16
    return 32


# ---------------------------------------------------------------------------
# Kernels
# ---------------------------------------------------------------------------
def _ln_lane_kernel(x_ref, w_ref, b_ref, o_ref, *, eps, inv_c):
    """Rows on sublanes, channels on lanes: normalize over the last dim."""
    x = x_ref[...].astype(jnp.float32)                     # (tile_n, C)
    u = jnp.sum(x, axis=-1, keepdims=True) * inv_c         # mean
    xc = x - u
    s = jnp.sum(xc * xc, axis=-1, keepdims=True) * inv_c   # biased variance
    y = xc * jax.lax.rsqrt(s + eps)
    o_ref[...] = (w_ref[...] * y + b_ref[...]).astype(o_ref.dtype)


def _ln_sublane_kernel(x_ref, w_ref, b_ref, o_ref, *, eps, inv_c):
    """Channels on sublanes, spatial dense on lanes: normalize over axis 0."""
    x = x_ref[0].astype(jnp.float32)                       # (C, tile_l)
    u = jnp.sum(x, axis=0, keepdims=True) * inv_c          # (1, tile_l)
    xc = x - u
    s = jnp.sum(xc * xc, axis=0, keepdims=True) * inv_c    # biased variance
    y = xc * jax.lax.rsqrt(s + eps)
    # w_ref / b_ref are (C, 1): broadcast over the lane (spatial) axis.
    o_ref[0] = (w_ref[...] * y + b_ref[...]).astype(o_ref.dtype)


# ---------------------------------------------------------------------------
# channels_first: x = (B, C, H, W), normalize over C
# ---------------------------------------------------------------------------
def layernorm_channels_first(x, weight, bias, eps=1e-6):
    B, C, H, W = x.shape
    L = H * W
    x3 = x.reshape(B, C, L)                        # contiguous reshape: free
    isz = jnp.dtype(x.dtype).itemsize

    # Lane tile: largest budget-fitting multiple of 128 (cdiv grid, masked tail).
    tile_l = max(128, (_BLOCK_BYTES_TARGET // max(C * isz, 1)) // 128 * 128)
    tile_l = min(tile_l, _round_up(L, 128))
    # Guarantee >= 2 grid steps (two-TensorCore friendliness) when splittable.
    if B * _cdiv(L, tile_l) < 2 and L > 128:
        tile_l = max(128, _round_up(_cdiv(L, 2), 128))

    w2 = weight.reshape(C, 1).astype(jnp.float32)
    b2 = bias.reshape(C, 1).astype(jnp.float32)

    out = pl.pallas_call(
        functools.partial(_ln_sublane_kernel, eps=eps, inv_c=1.0 / C),
        out_shape=jax.ShapeDtypeStruct((B, C, L), x.dtype),
        grid_spec=pltpu.PrefetchScalarGridSpec(
            num_scalar_prefetch=0,
            grid=(B, _cdiv(L, tile_l)),
            in_specs=[
                pl.BlockSpec((1, C, tile_l), lambda b, l: (b, 0, l)),
                pl.BlockSpec((C, 1), lambda b, l: (0, 0)),
                pl.BlockSpec((C, 1), lambda b, l: (0, 0)),
            ],
            out_specs=pl.BlockSpec((1, C, tile_l), lambda b, l: (b, 0, l)),
        ),
        compiler_params=pltpu.CompilerParams(
            dimension_semantics=("parallel", "parallel"),
            vmem_limit_bytes=_VMEM_LIMIT_BYTES),
    )(x3, w2, b2)
    return out.reshape(B, C, H, W)


# ---------------------------------------------------------------------------
# channels_last: x = (B, H, W, C), normalize over C
# ---------------------------------------------------------------------------
def layernorm_channels_last(x, weight, bias, eps=1e-6):
    B, H, W, C = x.shape
    N = B * H * W
    x2 = x.reshape(N, C)                           # contiguous reshape: free
    isz = jnp.dtype(x.dtype).itemsize
    sub = _sublane_multiple(x.dtype)

    # Row tile: budget-sized, dtype-aware sublane granularity, cdiv grid.
    # For C < 128 the block's last dim equals the full array dim (allowed);
    # the resulting masked stores are far cheaper than the wrapper transpose /
    # pad round trips they replace.
    tile_n = max(sub, (_BLOCK_BYTES_TARGET // max(C * isz, 1)) // sub * sub)
    tile_n = min(tile_n, _round_up(N, sub))
    # Guarantee >= 2 grid steps on the parallel axis when splittable.
    if _cdiv(N, tile_n) < 2 and N > sub:
        tile_n = max(sub, _round_up(_cdiv(N, 2), sub))

    w2 = weight.reshape(1, C).astype(jnp.float32)
    b2 = bias.reshape(1, C).astype(jnp.float32)

    out = pl.pallas_call(
        functools.partial(_ln_lane_kernel, eps=eps, inv_c=1.0 / C),
        out_shape=jax.ShapeDtypeStruct((N, C), x.dtype),
        grid_spec=pltpu.PrefetchScalarGridSpec(
            num_scalar_prefetch=0,
            grid=(_cdiv(N, tile_n),),
            in_specs=[
                pl.BlockSpec((tile_n, C), lambda i: (i, 0)),
                pl.BlockSpec((1, C), lambda i: (0, 0)),
                pl.BlockSpec((1, C), lambda i: (0, 0)),
            ],
            out_specs=pl.BlockSpec((tile_n, C), lambda i: (i, 0)),
        ),
        compiler_params=pltpu.CompilerParams(
            dimension_semantics=("parallel",),
            vmem_limit_bytes=_VMEM_LIMIT_BYTES),
    )(x2, w2, b2)
    return out.reshape(B, H, W, C)


# ---------------------------------------------------------------------------
# Reference (plain JAX) for sanity checks
# ---------------------------------------------------------------------------
def _ref_channels_last(x, w, b, eps):
    u = jnp.mean(x, axis=-1, keepdims=True)
    s = jnp.mean((x - u) ** 2, axis=-1, keepdims=True)
    return w * ((x - u) / jnp.sqrt(s + eps)) + b


def _ref_channels_first(x, w, b, eps):
    u = jnp.mean(x, axis=1, keepdims=True)
    s = jnp.mean((x - u) ** 2, axis=1, keepdims=True)
    xn = (x - u) / jnp.sqrt(s + eps)
    return w[:, None, None] * xn + b[:, None, None]


if __name__ == "__main__":
    key = jax.random.PRNGKey(0)
    k1, k2, k3 = jax.random.split(key, 3)
    eps = 1e-6

    # --- channels_first: NCHW input (ConvNeXt stem usage) -------------------
    B, C, H, W = 2, 4, 16, 16
    x_cf = jax.random.normal(k1, (B, C, H, W), dtype=jnp.float32)
    w_cf = jnp.ones((C,), jnp.float32) + 0.01 * jnp.arange(C, dtype=jnp.float32)
    b_cf = jnp.zeros((C,), jnp.float32) + 0.02 * jnp.arange(C, dtype=jnp.float32)

    y_cf = jax.block_until_ready(layernorm_channels_first(x_cf, w_cf, b_cf, eps))
    ref_cf = _ref_channels_first(x_cf, w_cf, b_cf, eps)
    assert y_cf.shape == x_cf.shape and y_cf.dtype == x_cf.dtype
    assert jnp.allclose(y_cf, ref_cf, atol=1e-5, rtol=1e-5)

    # --- channels_last, C < 128 --------------------------------------------
    B2, H2, W2, C2 = 2, 16, 16, 32
    x_cl = jax.random.normal(k2, (B2, H2, W2, C2), dtype=jnp.float32)
    w_cl = jnp.ones((C2,), jnp.float32) + 0.01 * jnp.arange(C2, dtype=jnp.float32)
    b_cl = jnp.zeros((C2,), jnp.float32) + 0.02 * jnp.arange(C2, dtype=jnp.float32)

    y_cl = jax.block_until_ready(layernorm_channels_last(x_cl, w_cl, b_cl, eps))
    ref_cl = _ref_channels_last(x_cl, w_cl, b_cl, eps)
    assert y_cl.shape == x_cl.shape and y_cl.dtype == x_cl.dtype
    assert jnp.allclose(y_cl, ref_cl, atol=1e-5, rtol=1e-5)

    # --- channels_last, C >= 128 (lane-dense path) ---------------------------
    B3, H3, W3, C3 = 2, 8, 8, 128
    x_cl2 = jax.random.normal(k3, (B3, H3, W3, C3), dtype=jnp.float32)
    w_cl2 = jnp.ones((C3,), jnp.float32) + 0.01 * jnp.arange(C3, dtype=jnp.float32)
    b_cl2 = jnp.zeros((C3,), jnp.float32) + 0.02 * jnp.arange(C3, dtype=jnp.float32)

    y_cl2 = jax.block_until_ready(layernorm_channels_last(x_cl2, w_cl2, b_cl2, eps))
    ref_cl2 = _ref_channels_last(x_cl2, w_cl2, b_cl2, eps)
    assert y_cl2.shape == x_cl2.shape and y_cl2.dtype == x_cl2.dtype
    assert jnp.allclose(y_cl2, ref_cl2, atol=1e-5, rtol=1e-5)

    print("KERNEL_OK")
</pallas_src>

<mosaic_0001>
module attributes {stable_mosaic.version = 11 : i64} {
  func.func @_ln_sublane_kernel(%arg0: i32, %arg1: i32, %arg2: memref<1x4x256xf32, #tpu.memory_space<vmem>>, %arg3: memref<4x1xf32, #tpu.memory_space<vmem>>, %arg4: memref<4x1xf32, #tpu.memory_space<vmem>>, %arg5: memref<1x4x256xf32, #tpu.memory_space<vmem>>) attributes {dimension_semantics = [#tpu.dimension_semantics<parallel>, #tpu.dimension_semantics<parallel>], iteration_bounds = array<i64: 2, 1>, scalar_prefetch = 0 : i64, scratch_operands = 0 : i64, tpu.core_type = #tpu.core_type<tc>, window_params = [{transform_indices = @transform_0, window_bounds = array<i64: 1, 4, 256>}, {pipeline_mode = #tpu.pipeline_mode<synchronous>, transform_indices = @transform_1, window_bounds = array<i64: 4, 1>}, {pipeline_mode = #tpu.pipeline_mode<synchronous>, transform_indices = @transform_2, window_bounds = array<i64: 4, 1>}, {transform_indices = @transform_3, window_bounds = array<i64: 1, 4, 256>}]} {
    %c0 = arith.constant 0 : index
    %c0_0 = arith.constant 0 : index
    %c0_1 = arith.constant 0 : index
    %0 = vector.load %arg2[%c0, %c0_0, %c0_1] : memref<1x4x256xf32, #tpu.memory_space<vmem>>, vector<1x4x256xf32>
    %1 = vector.shape_cast %0 : vector<1x4x256xf32> to vector<4x256xf32>
    %cst = arith.constant dense<0.000000e+00> : vector<256xf32>
    %2 = vector.multi_reduction <add>, %1, %cst [0] : vector<4x256xf32> to vector<256xf32>
    %3 = vector.shape_cast %2 : vector<256xf32> to vector<1x256xf32>
    %cst_2 = arith.constant 2.500000e-01 : f32
    %4 = vector.broadcast %cst_2 : f32 to vector<1x256xf32>
    %5 = arith.mulf %3, %4 : vector<1x256xf32>
    %6 = vector.broadcast %5 : vector<1x256xf32> to vector<4x256xf32>
    %7 = arith.subf %1, %6 : vector<4x256xf32>
    %8 = arith.mulf %7, %7 : vector<4x256xf32>
    %cst_3 = arith.constant dense<0.000000e+00> : vector<256xf32>
    %9 = vector.multi_reduction <add>, %8, %cst_3 [0] : vector<4x256xf32> to vector<256xf32>
    %10 = vector.shape_cast %9 : vector<256xf32> to vector<1x256xf32>
    %cst_4 = arith.constant 2.500000e-01 : f32
    %11 = vector.broadcast %cst_4 : f32 to vector<1x256xf32>
    %12 = arith.mulf %10, %11 : vector<1x256xf32>
    %cst_5 = arith.constant 9.99999997E-7 : f32
    %13 = vector.broadcast %cst_5 : f32 to vector<1x256xf32>
    %14 = arith.addf %12, %13 : vector<1x256xf32>
    %15 = math.rsqrt %14 : vector<1x256xf32>
    %16 = vector.broadcast %15 : vector<1x256xf32> to vector<4x256xf32>
    %17 = arith.mulf %7, %16 : vector<4x256xf32>
    %c0_6 = arith.constant 0 : index
    %c0_7 = arith.constant 0 : index
    %18 = vector.load %arg3[%c0_6, %c0_7] : memref<4x1xf32, #tpu.memory_space<vmem>>, vector<4x1xf32>
    %19 = vector.broadcast %18 : vector<4x1xf32> to vector<4x256xf32>
    %20 = arith.mulf %19, %17 : vector<4x256xf32>
    %c0_8 = arith.constant 0 : index
    %c0_9 = arith.constant 0 : index
    %21 = vector.load %arg4[%c0_8, %c0_9] : memref<4x1xf32, #tpu.memory_space<vmem>>, vector<4x1xf32>
    %22 = vector.broadcast %21 : vector<4x1xf32> to vector<4x256xf32>
    %23 = arith.addf %20, %22 : vector<4x256xf32>
    %c0_10 = arith.constant 0 : index
    %c0_11 = arith.constant 0 : index
    %c0_12 = arith.constant 0 : index
    %24 = vector.load %arg5[%c0_10, %c0_11, %c0_12] : memref<1x4x256xf32, #tpu.memory_space<vmem>>, vector<1x4x256xf32>
    %25 = vector.shape_cast %24 : vector<1x4x256xf32> to vector<4x256xf32>
    %26 = vector.shape_cast %23 : vector<4x256xf32> to vector<1x4x256xf32>
    tpu.vector_store %arg5[%c0_10, %c0_11, %c0_12], %26 {strides = array<i32>} : memref<1x4x256xf32, #tpu.memory_space<vmem>>, vector<1x4x256xf32>,
    return
  }
  func.func @transform_0(%arg0: i32, %arg1: i32) -> (i32, i32, i32) {
    %c0_i32 = arith.constant 0 : i32
    %c0_i32_0 = arith.constant 0 : i32
    return %arg0, %c0_i32, %arg1 : i32, i32, i32
  }
  func.func @transform_1(%arg0: i32, %arg1: i32) -> (i32, i32) {
    %c0_i32 = arith.constant 0 : i32
    %c0_i32_0 = arith.constant 0 : i32
    %c0_i32_1 = arith.constant 0 : i32
    return %c0_i32, %c0_i32_0 : i32, i32
  }
  func.func @transform_2(%arg0: i32, %arg1: i32) -> (i32, i32) {
    %c0_i32 = arith.constant 0 : i32
    %c0_i32_0 = arith.constant 0 : i32
    %c0_i32_1 = arith.constant 0 : i32
    return %c0_i32, %c0_i32_0 : i32, i32
  }
  func.func @transform_3(%arg0: i32, %arg1: i32) -> (i32, i32, i32) {
    %c0_i32 = arith.constant 0 : i32
    %c0_i32_0 = arith.constant 0 : i32
    return %arg0, %c0_i32, %arg1 : i32, i32, i32
  }
}

</mosaic_0001>

<llo_original>
// kernel: tpu_custom_call.1
$region0: #{tpu_custom_call.1}
  #allocation0 [shape = 'u32[]', space=smem, size = 0x4, offset = 0x4, fixed_abs, tag = 'smem constant byte address 0x4 - core index']
  #allocation1 [shape = 'u32[72,128]{1,0:T(1,128)}', space=vmem, size = 0x9000, scoped, tag = 'internal scratch']
  %s0 = inlined_call_operand.hbm [shape: f32[2,4,256], index: 0, kind: input, shape index: {}]
  %s1 = inlined_call_operand.vmem [shape: f32[4,1], index: 1, kind: input, shape index: {}]
  %s2 = inlined_call_operand.vmem [shape: f32[4,1], index: 2, kind: input, shape index: {}]
  %s3 = inlined_call_operand.hbm [shape: f32[2,4,256], index: 3, kind: output, shape index: {}]
  %s4 = sld [smem:[#allocation0]]
  $region49: #{tpu_custom_call.1} parent=0
    _
  %s6 = ssub.s32 1, %s4
  %s7 = scalar_select 0, %s6, %s4
  $region1: #{tpu_custom_call.1} parent=0
    #allocation2 [shape = 'u8[8192]{0}', space=vmem, size = 0x2000, scoped, tag = 'input window, operand 0']
    #allocation3 [shape = 's32[2]{0}', space=sflag, size = 0x8, scoped, tag = 'scoped memory for tpu_custom_call.1']
    #allocation4 [shape = 's32[2]{0}', space=sflag, size = 0x8, scoped, tag = 'scoped memory for tpu_custom_call.1']
    #allocation5 [shape = 'u8[8192]{0}', space=vmem, size = 0x2000, scoped, tag = 'output window, operand 0']
    %8 = vsyncpa [#allocation3], 0
    %s9 = scalar_lea.sflag [#allocation3], 1
    %10 = vsyncpa %s9, 0
    %11 = vsyncpa [#allocation4], 0
    %s12 = scalar_lea.sflag [#allocation4], 1
    %13 = vsyncpa %s12, 0
    loop: start=0, step=1, limit=4
    $region2: #{tpu_custom_call.1} parent=1 // loop_pre_header
      _
    $region3: #{tpu_custom_call.1} parent=1 // loop_header
      %s15 = sphi 0, %s19
      %p16 = scmp.ge.s32.totalorder %s15, 4
      %s22 = sphi 0, %s34
      %s23 = sphi 0, %s30
      %s24 = sphi 0, %s22
      %s25 = sphi 0, %s23
      %s26 = sphi 0, %s24
      %s27 = sphi 0, %s25
      %s39 = sphi 0, %s41
      %s42 = sphi 0, %s39
      %s43 = sphi 0, %s42
      %s59 = sphi 0, %s43
      %s63 = sphi 0, %s63
      %s65 = sphi 0, %s63
      %s66 = sphi 0, %s65
      %s80 = sphi 0, %s66
      %s84 = sphi 0, %s84
      %s86 = sphi 0, %s84
      %s87 = sphi 0, %s86
      %s101 = sphi 0, %s87
      %s109 = sphi 0, %s111
      %s112 = sphi 0, %s109
      %s113 = sphi 0, %s112
      %s129 = sphi 0, %s113
    $region4: #{tpu_custom_call.1} parent=1 // loop_header_branch
      %18 = sbr.rel (%p16) target = $region8
    $region5: #{tpu_custom_call.1} parent=1 // loop_body
      %s20 = ssub.s32 %s15, 1
      %s21 = ssub.s32 %s15, 2
      %s28 = sadd.s32 1, %s23
      %p29 = scmp.ge.s32.totalorder %s28, 1
      %s30 = scalar_select %p29, 0, %s28
      %s31 = sadd.s32 1, %s22
      %s32 = scalar_select %p29, %s31, %s22
      %p33 = scmp.ge.s32.totalorder %s32, 2
      %s34 = scalar_select %p33, 0, %s32
      %s35 = ssub.s32 %s22, %s34
      %s36 = ssub.s32 %s23, %s30
      %s37 = sor.u32 %s35, %s36
      %p38 = scmp.eq.s32.totalorder %s37, 0
      %s40 = sadd.s32 %s39, 1
      %s41 = scalar_select %p38, %s39, %s40
      %p44 = pneg %p38
      %p45 = scmp.eq.s32.totalorder %s15, 1
      %p46 = por %p44, %p45
      %p47 = scmp.ne.s32.totalorder %s39, %s42
      %p48 = scmp.eq.s32.totalorder %s15, 0
      %p49 = por %p47, %p48
      %p50 = scmp.ne.s32.totalorder %s39, %s42
      %p51 = scmp.eq.s32.totalorder %s20, 1
      %p52 = por %p50, %p51
      %p53 = scmp.ne.s32.totalorder %s42, %s43
      %p54 = scmp.eq.s32.totalorder %s20, 0
      %p55 = por %p53, %p54
      %p56 = scmp.ne.s32.totalorder %s42, %s43
      %p57 = scmp.eq.s32.totalorder %s21, 1
      %p58 = por %p56, %p57
      %p60 = scmp.ne.s32.totalorder %s43, %s59
      %p61 = scmp.eq.s32.totalorder %s21, 0
      %p62 = por %p60, %p61
      %s64 = sadd.s32 %s63, 1
      %p67 = scmp.eq.s32.totalorder %s15, 1
      %p68 = scmp.ne.s32.totalorder %s63, %s65
      %p69 = scmp.eq.s32.totalorder %s15, 0
      %p70 = por %p68, %p69
      %p71 = scmp.ne.s32.totalorder %s63, %s65
      %p72 = scmp.eq.s32.totalorder %s20, 1
      %p73 = por %p71, %p72
      %p74 = scmp.ne.s32.totalorder %s65, %s66
      %p75 = scmp.eq.s32.totalorder %s20, 0
      %p76 = por %p74, %p75
      %p77 = scmp.ne.s32.totalorder %s65, %s66
      %p78 = scmp.eq.s32.totalorder %s21, 1
      %p79 = por %p77, %p78
      %p81 = scmp.ne.s32.totalorder %s66, %s80
      %p82 = scmp.eq.s32.totalorder %s21, 0
      %p83 = por %p81, %p82
      %s85 = sadd.s32 %s84, 1
      %p88 = scmp.eq.s32.totalorder %s15, 1
      %p89 = scmp.ne.s32.totalorder %s84, %s86
      %p90 = scmp.eq.s32.totalorder %s15, 0
      %p91 = por %p89, %p90
      %p92 = scmp.ne.s32.totalorder %s84, %s86
      %p93 = scmp.eq.s32.totalorder %s20, 1
      %p94 = por %p92, %p93
      %p95 = scmp.ne.s32.totalorder %s86, %s87
      %p96 = scmp.eq.s32.totalorder %s20, 0
      %p97 = por %p95, %p96
      %p98 = scmp.ne.s32.totalorder %s86, %s87
      %p99 = scmp.eq.s32.totalorder %s21, 1
      %p100 = por %p98, %p99
      %p102 = scmp.ne.s32.totalorder %s87, %s101
      %p103 = scmp.eq.s32.totalorder %s21, 0
      %p104 = por %p102, %p103
      %s105 = ssub.s32 %s22, %s34
      %s106 = ssub.s32 %s23, %s30
      %s107 = sor.u32 %s105, %s106
      %p108 = scmp.eq.s32.totalorder %s107, 0
      %s110 = sadd.s32 %s109, 1
      %s111 = scalar_select %p108, %s109, %s110
      %p114 = pneg %p108
      %p115 = scmp.eq.s32.totalorder %s15, 1
      %p116 = por %p114, %p115
      %p117 = scmp.ne.s32.totalorder %s109, %s112
      %p118 = scmp.eq.s32.totalorder %s15, 0
      %p119 = por %p117, %p118
      %p120 = scmp.ne.s32.totalorder %s109, %s112
      %p121 = scmp.eq.s32.totalorder %s20, 1
      %p122 = por %p120, %p121
      %p123 = scmp.ne.s32.totalorder %s112, %s113
      %p124 = scmp.eq.s32.totalorder %s20, 0
      %p125 = por %p123, %p124
      %p126 = scmp.ne.s32.totalorder %s112, %s113
      %p127 = scmp.eq.s32.totalorder %s21, 1
      %p128 = por %p126, %p127
      %p130 = scmp.ne.s32.totalorder %s113, %s129
      %p131 = scmp.eq.s32.totalorder %s21, 0
      %p132 = por %p130, %p131
      %p133 = scmp.le.s32.totalorder 1, %s15
      %p134 = scmp.lt.s32.totalorder %s15, 3
      %p135 = pnand %p133, %p134
      %p136 = pneg %p135
      // Predicated region
      $region9: #{tpu_custom_call.1} parent=5 // pred_check
        _
      $region10: #{tpu_custom_call.1} parent=5 // pred_check_branch
        %138 = sbr.rel (%p135) target = $region12
      $region11: #{tpu_custom_call.1} parent=5 // pred_region
        %s139 = ssub.s32 %s15, 1
        // Predicated region
        $region13: #{tpu_custom_call.1} parent=11 // pred_check
          %p140 = pneg %p76
        $region14: #{tpu_custom_call.1} parent=11 // pred_check_branch
          %142 = sbr.rel (%p140) target = $region16
        $region15: #{tpu_custom_call.1} parent=11 // pred_region
          _
        $region16: #{tpu_custom_call.1} parent=11 // pred_fallthru
          _
        // Predicated region
        $region17: #{tpu_custom_call.1} parent=11 // pred_check
          %p143 = pneg %p97
        $region18: #{tpu_custom_call.1} parent=11 // pred_check_branch
          %145 = sbr.rel (%p143) target = $region20
        $region19: #{tpu_custom_call.1} parent=11 // pred_region
          _
        $region20: #{tpu_custom_call.1} parent=11 // pred_fallthru
          _
      $region12: #{tpu_custom_call.1} parent=5 // pred_fallthru
        _
      %p146 = scmp.lt.s32.totalorder %s15, 2
      // Predicated region
      $region21: #{tpu_custom_call.1} parent=5 // pred_check
        %p147 = pneg %p146
      $region22: #{tpu_custom_call.1} parent=5 // pred_check_branch
        %149 = sbr.rel (%p147) target = $region24
      $region23: #{tpu_custom_call.1} parent=5 // pred_region
        // Predicated region
        $region25: #{tpu_custom_call.1} parent=23 // pred_check
          %p150 = pneg %p49
        $region26: #{tpu_custom_call.1} parent=23 // pred_check_branch
          %152 = sbr.rel (%p150) target = $region28
        $region27: #{tpu_custom_call.1} parent=23 // pred_region
          %s153 = sand.u32 %s39, 1
          %s154 = scalar_lea.sflag [#allocation3], %s153
          %s155 = sand.u32 %s39, 1
          %s156 = smul.addr %s155, 8
          %s157 = scalar_lea.vmem [#allocation2], %s156
          %s158 = smul.u32 2, %s23
          %160 = vsyncadd %s154, 0
          %s161 = smul.addr %s22, 2
          %s162 = sadd.s32 %s158, %s161
          %s163 = smul.addr %s162, 4
          %s164 = scalar_lea.hbm %s0, %s163
          %s166 = sshll.u32 %s164, 4
          %s167 = int_to_ptr.hbm [resolvable:$true] %s166
          %s168 = sshll.u32 %s157, 4
          %s169 = int_to_ptr.vmem [resolvable:$true] %s168
          %171 = dma.hbm_to_vmem [thread:$0]  %s167, 128, %s169, %s154
        $region28: #{tpu_custom_call.1} parent=23 // pred_fallthru
          _
      $region24: #{tpu_custom_call.1} parent=5 // pred_fallthru
        _
      %p172 = scmp.le.s32.totalorder 1, %s15
      %p173 = scmp.lt.s32.totalorder %s15, 3
      %p174 = pnand %p172, %p173
      %p175 = pneg %p174
      // Predicated region
      $region29: #{tpu_custom_call.1} parent=5 // pred_check
        _
      $region30: #{tpu_custom_call.1} parent=5 // pred_check_branch
        %177 = sbr.rel (%p174) target = $region32
      $region31: #{tpu_custom_call.1} parent=5 // pred_region
        %s178 = ssub.s32 %s15, 1
        %s179 = sand.u32 %s42, 1
        %s180 = scalar_lea.sflag [#allocation3], %s179
        %s181 = sand.u32 %s42, 1
        %s182 = smul.addr %s181, 8
        %s183 = scalar_lea.vmem [#allocation2], %s182
        // Predicated region
        $region33: #{tpu_custom_call.1} parent=31 // pred_check
          %p184 = pneg %p55
        $region34: #{tpu_custom_call.1} parent=31 // pred_check_branch
          %186 = sbr.rel (%p184) target = $region36
        $region35: #{tpu_custom_call.1} parent=31 // pred_region
          %188 = dma.done %s180, 128
        $region36: #{tpu_custom_call.1} parent=31 // pred_fallthru
          _
        %s189 = sand.u32 %s42, 1
        %s190 = scalar_lea.sflag [#allocation3], %s189
        %s191 = sand.u32 %s42, 1
        %s192 = smul.addr %s191, 8
        %s193 = scalar_lea.vmem [#allocation2], %s192
        %p194 = pneg %p55
        %p195 = pneg %p52
        %p196 = pneg %p76
        %p197 = pneg %p73
        %p198 = pneg %p97
        %p199 = pneg %p94
        %p200 = pneg %p125
        %p201 = pneg %p122
        %s202 = sand.u32 %s112, 1
        %s203 = scalar_lea.sflag [#allocation4], %s202
        %s204 = sand.u32 %s112, 1
        %s205 = smul.addr %s204, 8
        %s206 = scalar_lea.vmem [#allocation5], %s205
        %s207 = smul.u32 2, %s25
        %s208 = smul.u32 2, %s25
        %v209 = vld [vmem:[%s183] sm:$0xff]
        %211 = vst [vmem:[#allocation1] ss:$2 sm:$0xff] %v209
        %v212 = vld.sshfl [vmem:[#allocation1] sm:$0xff pattern:$0x75316420]
        %v213 = vld.sshfl [vmem:[#allocation1 + $0x8] sm:$0xff pattern:$0x75316420]
        %vm216 = vcmask 1043456
        %v217 = vsel %vm216, %v212, 0.0
        %v218 = vrot.slane %v217, 4
        %v219 = vadd.f32 %v217, %v218
        %v220 = vrot.slane %v219, 2
        %v221 = vadd.f32 %v219, %v220
        %v222 = vrot.slane %v221, 1
        %v223 = vadd.f32 %v221, %v222
        %v224 = vsel %vm216, %v213, 0.0
        %v225 = vrot.slane %v224, 4
        %v226 = vadd.f32 %v224, %v225
        %v227 = vrot.slane %v226, 2
        %v228 = vadd.f32 %v226, %v227
        %v229 = vrot.slane %v228, 1
        %v230 = vadd.f32 %v228, %v229
        %v231 = vmul.f32 %v223, 0.25
        %v232 = vmul.f32 %v230, 0.25
        %v235 = vrot.slane %v232, 4
        %v236 = vsel %vm216, %v231, %v235
        %v238 = vsub.f32 %v209, %v236
        %v239 = vmul.f32 %v238, %v238
        %241 = vst [vmem:[#allocation1] ss:$2 sm:$0xff] %v239
        %v242 = vld.sshfl [vmem:[#allocation1] sm:$0xff pattern:$0x75316420]
        %v243 = vld.sshfl [vmem:[#allocation1 + $0x8] sm:$0xff pattern:$0x75316420]
        %v246 = vsel %vm216, %v242, 0.0
        %v247 = vrot.slane %v246, 4
        %v248 = vadd.f32 %v246, %v247
        %v249 = vrot.slane %v248, 2
        %v250 = vadd.f32 %v248, %v249
        %v251 = vrot.slane %v250, 1
        %v252 = vadd.f32 %v250, %v251
        %v253 = vsel %vm216, %v243, 0.0
        %v254 = vrot.slane %v253, 4
        %v255 = vadd.f32 %v253, %v254
        %v256 = vrot.slane %v255, 2
        %v257 = vadd.f32 %v255, %v256
        %v258 = vrot.slane %v257, 1
        %v259 = vadd.f32 %v257, %v258
        %v260 = vmul.f32 %v252, 0.25
        %v261 = vmul.f32 %v259, 0.25
        %v262 = vadd.f32 %v260, 1e-06
        %v263 = vadd.f32 %v261, 1e-06
        %v264 = vrsqrt.pop %v262
        %v265 = vmul.f32 %v264, %v262
        %v266 = vmul.f32 %v265, %v264
        %v267 = vmul.f32 0.5, %v266
        %v268 = vsub.f32 1.5, %v267
        %v269 = vmul.f32 %v264, %v268
        %vm270 = vweird.f32 %v262
        %vm271 = vweird.f32 %v264
        %vm272 = vmor %vm270, %vm271
        %v273 = vsel %vm272, %v264, %v269
        %v274 = vrsqrt.pop %v263
        %v275 = vmul.f32 %v274, %v263
        %v276 = vmul.f32 %v275, %v274
        %v277 = vmul.f32 0.5, %v276
        %v278 = vsub.f32 1.5, %v277
        %v279 = vmul.f32 %v274, %v278
        %vm280 = vweird.f32 %v263
        %vm281 = vweird.f32 %v274
        %vm282 = vmor %vm280, %vm281
        %v283 = vsel %vm282, %v274, %v279
        %v286 = vrot.slane %v283, 4
        %v287 = vsel %vm216, %v273, %v286
        %v289 = vmul.f32 %v238, %v287
        %v290 = vld [vmem:[%s1] sm:$0xf]
        %292 = vset.pattern.permute.xlu0 0
        %293 = vperm.xlu0 %292, %v290
        %v294 = vpop.permute.xlu0 %293
        %297 = vst [vmem:[#allocation1] ss:$2 sm:$0xff] %v289
        %v298 = vld.sshfl [vmem:[#allocation1] sm:$0xff pattern:$0x75316420]
        %v299 = vld.sshfl [vmem:[#allocation1 + $0x8] sm:$0xff pattern:$0x75316420]
        %v302 = vmul.f32 %v294, %v298
        %v303 = vmul.f32 %v294, %v299
        %v304 = vld [vmem:[%s2] sm:$0xf]
        %306 = vset.pattern.permute.xlu0 0
        %307 = vperm.xlu0 %306, %v304
        %v308 = vpop.permute.xlu0 %307
        %v310 = vadd.f32 %v302, %v308
        %v311 = vadd.f32 %v303, %v308
        %v314 = vrot.slane %v311, 4
        %v315 = vsel %vm216, %v310, %v314
        %317 = vst [vmem:[%s206] sm:$0xff] %v315
        %s318 = sand.u32 %s112, 1
        %s319 = scalar_lea.sflag [#allocation4], %s318
        %s320 = sand.u32 %s112, 1
        %s321 = smul.addr %s320, 8
        %s322 = scalar_lea.vmem [#allocation5], %s321
        // Predicated region
        $region37: #{tpu_custom_call.1} parent=31 // pred_check
          %p323 = pneg %p122
        $region38: #{tpu_custom_call.1} parent=31 // pred_check_branch
          %325 = sbr.rel (%p323) target = $region40
        $region39: #{tpu_custom_call.1} parent=31 // pred_region
          %s326 = smul.u32 2, %s25
          %328 = vsyncadd %s319, 0
          %s329 = smul.addr %s24, 2
          %s330 = sadd.s32 %s326, %s329
          %s331 = smul.addr %s330, 4
          %s332 = scalar_lea.hbm %s3, %s331
          %s334 = sshll.u32 %s322, 4
          %s335 = int_to_ptr.vmem [resolvable:$true] %s334
          %s336 = sshll.u32 %s332, 4
          %s337 = int_to_ptr.hbm [resolvable:$true] %s336
          %339 = dma.vmem_to_hbm [thread:$0]  %s335, 128, %s337, %s319
        $region40: #{tpu_custom_call.1} parent=31 // pred_fallthru
          _
      $region32: #{tpu_custom_call.1} parent=5 // pred_fallthru
        _
      %p340 = scmp.le.s32.totalorder 2, %s15
      // Predicated region
      $region41: #{tpu_custom_call.1} parent=5 // pred_check
        %p341 = pneg %p340
      $region42: #{tpu_custom_call.1} parent=5 // pred_check_branch
        %343 = sbr.rel (%p341) target = $region44
      $region43: #{tpu_custom_call.1} parent=5 // pred_region
        %s344 = ssub.s32 %s15, 2
        // Predicated region
        $region45: #{tpu_custom_call.1} parent=43 // pred_check
          %p345 = pneg %p128
        $region46: #{tpu_custom_call.1} parent=43 // pred_check_branch
          %347 = sbr.rel (%p345) target = $region48
        $region47: #{tpu_custom_call.1} parent=43 // pred_region
          %s348 = sand.u32 %s113, 1
          %s349 = scalar_lea.sflag [#allocation4], %s348
          %s350 = sand.u32 %s113, 1
          %s351 = smul.addr %s350, 8
          %s352 = scalar_lea.vmem [#allocation5], %s351
          %354 = dma.done %s349, 128
        $region48: #{tpu_custom_call.1} parent=43 // pred_fallthru
          _
      $region44: #{tpu_custom_call.1} parent=5 // pred_fallthru
        _
    $region6: #{tpu_custom_call.1} parent=1 // loop_footer
      %s19 = sadd.s32 1, %s15
    $region7: #{tpu_custom_call.1} parent=1 // loop_footer_branch
      %14 = sbr.rel target = $region3
    $region8: #{tpu_custom_call.1} parent=1 // loop_exit
      _
    %355 = vsyncpa [#allocation3], 1
    %s356 = scalar_lea.sflag [#allocation3], 1
    %357 = vsyncpa %s356, 1
    %358 = vsyncpa [#allocation4], 1
    %s359 = scalar_lea.sflag [#allocation4], 1
    %360 = vsyncpa %s359, 1

</llo_original>
